<compile_context>
chip_gen: v7x
topology: tpu7x:2x2x1
jax: 0.10.0
libtpu: 0.0.40
codegen_flags: <defaults>
</compile_context>

<pallas_src>
import functools

import jax
import jax.numpy as jnp
from jax.experimental import pallas as pl
from jax.experimental.pallas import tpu as pltpu


_LANE = 128


def _round_up(x, m):
    return (x + m - 1) // m * m


def _vmem_capacity_bytes():
    """VMEM capacity of the local chip; conservative v7x default on failure."""
    try:
        cap = int(pltpu.get_tpu_info().vmem_capacity_bytes)
        if cap > 0:
            return cap
    except Exception:   # no TPU visible / older API -> assume smallest chip
        pass
    return 64 * 1024 * 1024


def _mlp_kernel(n_layers, precision, x_ref, *refs):
    """Fused MLP over one row tile.

    refs = (w0, b0, w1, b1, ..., w_{L-1}, b_{L-1}, out_ref).
    Weights are (in, out_pad) in the compute dtype; biases are (1, out_pad)
    float32.  Matmuls accumulate in f32 on the MXU; bias add / ReLU stay f32.
    """
    out_ref = refs[-1]
    wb = refs[:-1]

    h = x_ref[...]                                       # compute dtype
    for i in range(n_layers):
        w = wb[2 * i][...]                               # (in, out_pad)
        b = wb[2 * i + 1][...]                           # (1, out_pad) f32
        acc = jnp.dot(h, w, preferred_element_type=jnp.float32,
                      precision=precision) + b
        if i < n_layers - 1:
            acc = jnp.maximum(acc, 0.0)                  # ReLU (all but last)
            h = acc.astype(w.dtype)                      # back to MXU dtype
        else:
            h = acc
    out_ref[...] = h.astype(out_ref.dtype)


def _build_call(x2, weights_pad, biases_pad, *, tile_m, n_tiles, out_dim,
                out_dtype, vmem_limit, precision, single_buffer_weights):
    n_layers = len(weights_pad)
    M, xy = x2.shape

    # Weights/biases are grid-invariant -> single buffer (double-buffering
    # them is pure VMEM waste).  The streamed x/out blocks keep the default
    # double-buffered pipeline.
    w_kwargs = (dict(pipeline_mode=pl.Buffered(1))
                if single_buffer_weights else {})

    in_specs = [pl.BlockSpec((tile_m, xy), lambda i: (i, 0))]
    operands = [x2]
    for w, b in zip(weights_pad, biases_pad):
        operands += [w, b]
        in_specs.append(pl.BlockSpec(w.shape, lambda i: (0, 0), **w_kwargs))
        in_specs.append(pl.BlockSpec(b.shape, lambda i: (0, 0), **w_kwargs))

    return pl.pallas_call(
        functools.partial(_mlp_kernel, n_layers, precision),
        out_shape=jax.ShapeDtypeStruct((M, out_dim), out_dtype),
        grid=(n_tiles,),
        in_specs=in_specs,
        out_specs=pl.BlockSpec((tile_m, out_dim), lambda i: (i, 0)),
        compiler_params=pltpu.CompilerParams(
            dimension_semantics=("parallel",),
            vmem_limit_bytes=vmem_limit),
    )(*operands)


def batch_mlp_pallas(x, weights, biases, *, tile_m=None,
                     use_bf16_compute=False, precision=None):
    """Pallas BatchMLP forward.

    x:       (batch, num_points, xy_size)
    weights: list of (in_dim, out_dim) arrays  (== PyTorch weight.T)
    biases:  list of (out_dim,) arrays
    tile_m:  optional row-tile override (auto-sized per chip generation if None)
    use_bf16_compute: cast f32 inputs/weights to bf16 on the MXU (f32 accum)
    precision: optional lax.Precision for the matmuls (e.g. HIGHEST for f32 parity)
    """
    B, N, xy = x.shape
    M = B * N
    out_dim = weights[-1].shape[1]
    out_dtype = x.dtype

    compute_dtype = (jnp.bfloat16
                     if (x.dtype == jnp.bfloat16 or use_bf16_compute)
                     else jnp.float32)
    c_bytes = jnp.dtype(compute_dtype).itemsize
    o_bytes = jnp.dtype(out_dtype).itemsize
    sub = 16 if compute_dtype == jnp.bfloat16 else 8   # dtype-native sublane tile

    # Hidden widths lane-padded to 128 (dense activations / MXU); the streamed
    # input width xy and the stored output width out_dim stay UNPADDED (a block
    # last-dim equal to the full array dim is legal), which is the big HBM
    # traffic win for small xy / out_dim.
    dims = [w.shape[1] for w in weights]
    dims_pad = [_round_up(d, _LANE) for d in dims[:-1]] + [dims[-1]]

    # Pad/cast resident weights + biases (tiny vs. the streamed x traffic).
    # Zero padding is exact: zero cols stay zero through bias=0 and ReLU, zero
    # weight rows contribute nothing.
    weights_pad, biases_pad = [], []
    in_d, in_d_pad = xy, xy
    weight_bytes = 0
    for w, b, d, d_pad in zip(weights, biases, dims, dims_pad):
        w_p = jnp.pad(w.astype(compute_dtype),
                      ((0, in_d_pad - in_d), (0, d_pad - d)))
        b_p = jnp.pad(b.astype(jnp.float32), (0, d_pad - d)).reshape(1, d_pad)
        weights_pad.append(w_p)
        biases_pad.append(b_p)
        weight_bytes += w_p.size * c_bytes + b_p.size * 4
        in_d, in_d_pad = d, d_pad

    # Generation-aware VMEM sizing (v5e/v6e: 128 MiB, v7x: 64 MiB).
    cap = _vmem_capacity_bytes()
    vmem_limit = min(cap - (8 << 20), int(cap * 0.90))
    budget = int(vmem_limit * 0.75)
    tile_max = 8192 if cap >= (96 << 20) else 4096

    m_cap = _round_up(max(M, 1), sub)
    if tile_m is None:
        tile_m = tile_max
    tile_m = _round_up(max(sub, min(tile_m, m_cap)), sub)

    # Per-row streamed/live VMEM: double-buffered x + out blocks, widest live
    # activation in f32 plus a compute-dtype copy (x2 fudge factor).
    widest = max([xy, out_dim] + list(dims_pad))
    per_row = (xy * c_bytes * 2 + out_dim * o_bytes * 2
               + widest * (4 + c_bytes) * 2)
    avail = max(budget - weight_bytes, budget // 4)
    # TODO(synk): MLPs whose resident padded weights alone exceed the VMEM
    # budget need per-layer K/N weight tiling; we deliberately do not collapse
    # tile_m below 256 for that case.
    floor_m = min(m_cap, 256)
    while tile_m > floor_m and tile_m * per_row > avail:
        tile_m = _round_up(max(floor_m, tile_m // 2), sub)

    n_tiles = -(-M // tile_m)       # ragged final block handled by Pallas

    # No row/lane padding of x: reshape is free, cast is a no-op on the f32 path.
    x2 = x.reshape(M, xy).astype(compute_dtype)

    call = functools.partial(
        _build_call, x2, weights_pad, biases_pad,
        tile_m=tile_m, n_tiles=n_tiles, out_dim=out_dim, out_dtype=out_dtype,
        vmem_limit=vmem_limit, precision=precision)
    try:
        out2 = call(single_buffer_weights=True)
    except (TypeError, pltpu.LoweringException):
        # Pallas version without pipeline_mode / Buffered(1): fall back to the
        # default double-buffered pipeline (still correct, a bit more VMEM).
        out2 = call(single_buffer_weights=False)

    return out2.reshape(B, N, out_dim)


def _init_params(key, xy_size, output_sizes):
    """Deterministic PyTorch-style Linear init (uniform(-1/sqrt(fan_in), ..))."""
    weights, biases = [], []
    in_dim = xy_size
    for out_dim in output_sizes:
        key, kw, kb = jax.random.split(key, 3)
        bound = 1.0 / jnp.sqrt(jnp.float32(in_dim))
        # stored as (in_dim, out_dim) == PyTorch weight.T
        w = jax.random.uniform(kw, (in_dim, out_dim), jnp.float32, -bound, bound)
        b = jax.random.uniform(kb, (out_dim,), jnp.float32, -bound, bound)
        weights.append(w)
        biases.append(b)
        in_dim = out_dim
    return weights, biases


def _reference(x, weights, biases):
    B, N, xy = x.shape
    h = x.reshape(-1, xy)
    for i, (w, b) in enumerate(zip(weights, biases)):
        h = h @ w + b
        if i < len(weights) - 1:
            h = jnp.maximum(h, 0.0)
    return h.reshape(B, N, weights[-1].shape[1])


if __name__ == "__main__":
    key = jax.random.PRNGKey(0)

    # Case 1: small shapes consistent with BatchMLP.forward.
    batch, num_points, xy_size = 2, 8, 4
    output_sizes = [32, 32, 16]
    key, kx, kp = jax.random.split(key, 3)
    x = jax.random.normal(kx, (batch, num_points, xy_size), jnp.float32)
    weights, biases = _init_params(kp, xy_size, output_sizes)

    out = jax.block_until_ready(batch_mlp_pallas(x, weights, biases))
    ref = _reference(x, weights, biases)
    assert out.shape == (batch, num_points, output_sizes[-1])
    assert jnp.allclose(out, ref, atol=1e-4, rtol=1e-4)

    # Case 2: larger row count, auto tile sizing (single grid step).
    batch2, num_points2 = 4, 150
    key, kx2 = jax.random.split(key)
    x_big = jax.random.normal(kx2, (batch2, num_points2, xy_size), jnp.float32)
    out_big = jax.block_until_ready(batch_mlp_pallas(x_big, weights, biases))
    ref_big = _reference(x_big, weights, biases)
    assert out_big.shape == (batch2, num_points2, output_sizes[-1])
    assert jnp.allclose(out_big, ref_big, atol=1e-4, rtol=1e-4)

    # Case 3: forced small tile -> multi-step grid with a ragged final block
    # (exercises masked output stores on the last tile, no row padding).
    out_tiled = jax.block_until_ready(
        batch_mlp_pallas(x_big, weights, biases, tile_m=128))
    assert jnp.allclose(out_tiled, ref_big, atol=1e-4, rtol=1e-4)

    # Case 4: row count not a multiple of the sublane tile (M=21 < tile_m=24)
    # -> single ragged block.
    batch3, num_points3 = 3, 7
    key, kx3 = jax.random.split(key)
    x_rag = jax.random.normal(kx3, (batch3, num_points3, xy_size), jnp.float32)
    out_rag = jax.block_until_ready(batch_mlp_pallas(x_rag, weights, biases))
    ref_rag = _reference(x_rag, weights, biases)
    assert out_rag.shape == (batch3, num_points3, output_sizes[-1])
    assert jnp.allclose(out_rag, ref_rag, atol=1e-4, rtol=1e-4)

    print("KERNEL_OK")
</pallas_src>

<mosaic_0001>
module attributes {stable_mosaic.version = 11 : i64} {
  func.func @_mlp_kernel(%arg0: i32, %arg1: memref<16x4xf32, #tpu.memory_space<vmem>>, %arg2: memref<4x128xf32, #tpu.memory_space<vmem>>, %arg3: memref<1x128xf32, #tpu.memory_space<vmem>>, %arg4: memref<128x128xf32, #tpu.memory_space<vmem>>, %arg5: memref<1x128xf32, #tpu.memory_space<vmem>>, %arg6: memref<128x16xf32, #tpu.memory_space<vmem>>, %arg7: memref<1x16xf32, #tpu.memory_space<vmem>>, %arg8: memref<16x16xf32, #tpu.memory_space<vmem>>) attributes {dimension_semantics = [#tpu.dimension_semantics<parallel>], iteration_bounds = array<i64: 1>, scalar_prefetch = 0 : i64, scratch_operands = 0 : i64, tpu.core_type = #tpu.core_type<tc>, window_params = [{transform_indices = @transform_0, window_bounds = array<i64: 16, 4>}, {pipeline_mode = #tpu.pipeline_mode<synchronous>, transform_indices = @transform_1, window_bounds = array<i64: 4, 128>}, {pipeline_mode = #tpu.pipeline_mode<synchronous>, transform_indices = @transform_2, window_bounds = array<i64: 1, 128>}, {pipeline_mode = #tpu.pipeline_mode<synchronous>, transform_indices = @transform_3, window_bounds = array<i64: 128, 128>}, {pipeline_mode = #tpu.pipeline_mode<synchronous>, transform_indices = @transform_4, window_bounds = array<i64: 1, 128>}, {pipeline_mode = #tpu.pipeline_mode<synchronous>, transform_indices = @transform_5, window_bounds = array<i64: 128, 16>}, {pipeline_mode = #tpu.pipeline_mode<synchronous>, transform_indices = @transform_6, window_bounds = array<i64: 1, 16>}, {transform_indices = @transform_7, window_bounds = array<i64: 16, 16>}]} {
    %c0 = arith.constant 0 : index
    %c0_0 = arith.constant 0 : index
    %0 = vector.load %arg1[%c0, %c0_0] : memref<16x4xf32, #tpu.memory_space<vmem>>, vector<16x4xf32>
    %c0_1 = arith.constant 0 : index
    %c0_2 = arith.constant 0 : index
    %1 = vector.load %arg2[%c0_1, %c0_2] : memref<4x128xf32, #tpu.memory_space<vmem>>, vector<4x128xf32>
    %c0_3 = arith.constant 0 : index
    %c0_4 = arith.constant 0 : index
    %2 = vector.load %arg3[%c0_3, %c0_4] : memref<1x128xf32, #tpu.memory_space<vmem>>, vector<1x128xf32>
    %cst = arith.constant dense<0.000000e+00> : vector<16x128xf32>
    %3 = tpu.matmul %0, %1, %cst {dimension_numbers = #tpu.dot_dimension_numbers<[1], [0], [0], [1], [0, 0, 1, 1], [], []>} : vector<16x4xf32>, vector<4x128xf32>, vector<16x128xf32> -> vector<16x128xf32>
    %4 = vector.broadcast %2 : vector<1x128xf32> to vector<16x128xf32>
    %5 = arith.addf %3, %4 : vector<16x128xf32>
    %cst_5 = arith.constant 0.000000e+00 : f32
    %6 = vector.broadcast %cst_5 : f32 to vector<16x128xf32>
    %7 = arith.maximumf %5, %6 : vector<16x128xf32>
    %c0_6 = arith.constant 0 : index
    %c0_7 = arith.constant 0 : index
    %8 = vector.load %arg4[%c0_6, %c0_7] : memref<128x128xf32, #tpu.memory_space<vmem>>, vector<128x128xf32>
    %c0_8 = arith.constant 0 : index
    %c0_9 = arith.constant 0 : index
    %9 = vector.load %arg5[%c0_8, %c0_9] : memref<1x128xf32, #tpu.memory_space<vmem>>, vector<1x128xf32>
    %cst_10 = arith.constant dense<0.000000e+00> : vector<16x128xf32>
    %10 = tpu.matmul %7, %8, %cst_10 {dimension_numbers = #tpu.dot_dimension_numbers<[1], [0], [0], [1], [0, 0, 1, 1], [], []>} : vector<16x128xf32>, vector<128x128xf32>, vector<16x128xf32> -> vector<16x128xf32>
    %11 = vector.broadcast %9 : vector<1x128xf32> to vector<16x128xf32>
    %12 = arith.addf %10, %11 : vector<16x128xf32>
    %cst_11 = arith.constant 0.000000e+00 : f32
    %13 = vector.broadcast %cst_11 : f32 to vector<16x128xf32>
    %14 = arith.maximumf %12, %13 : vector<16x128xf32>
    %c0_12 = arith.constant 0 : index
    %c0_13 = arith.constant 0 : index
    %15 = vector.load %arg6[%c0_12, %c0_13] : memref<128x16xf32, #tpu.memory_space<vmem>>, vector<128x16xf32>
    %c0_14 = arith.constant 0 : index
    %c0_15 = arith.constant 0 : index
    %16 = vector.load %arg7[%c0_14, %c0_15] : memref<1x16xf32, #tpu.memory_space<vmem>>, vector<1x16xf32>
    %cst_16 = arith.constant dense<0.000000e+00> : vector<16x16xf32>
    %17 = tpu.matmul %14, %15, %cst_16 {dimension_numbers = #tpu.dot_dimension_numbers<[1], [0], [0], [1], [0, 0, 1, 1], [], []>} : vector<16x128xf32>, vector<128x16xf32>, vector<16x16xf32> -> vector<16x16xf32>
    %18 = vector.broadcast %16 : vector<1x16xf32> to vector<16x16xf32>
    %19 = arith.addf %17, %18 : vector<16x16xf32>
    %c0_17 = arith.constant 0 : index
    %c0_18 = arith.constant 0 : index
    %20 = vector.load %arg8[%c0_17, %c0_18] : memref<16x16xf32, #tpu.memory_space<vmem>>, vector<16x16xf32>
    tpu.vector_store %arg8[%c0_17, %c0_18], %19 {strides = array<i32>} : memref<16x16xf32, #tpu.memory_space<vmem>>, vector<16x16xf32>,
    return
  }
  func.func @transform_0(%arg0: i32) -> (i32, i32) {
    %c0_i32 = arith.constant 0 : i32
    %c0_i32_0 = arith.constant 0 : i32
    return %arg0, %c0_i32 : i32, i32
  }
  func.func @transform_1(%arg0: i32) -> (i32, i32) {
    %c0_i32 = arith.constant 0 : i32
    %c0_i32_0 = arith.constant 0 : i32
    %c0_i32_1 = arith.constant 0 : i32
    return %c0_i32, %c0_i32_0 : i32, i32
  }
  func.func @transform_2(%arg0: i32) -> (i32, i32) {
    %c0_i32 = arith.constant 0 : i32
    %c0_i32_0 = arith.constant 0 : i32
    %c0_i32_1 = arith.constant 0 : i32
    return %c0_i32, %c0_i32_0 : i32, i32
  }
  func.func @transform_3(%arg0: i32) -> (i32, i32) {
    %c0_i32 = arith.constant 0 : i32
    %c0_i32_0 = arith.constant 0 : i32
    %c0_i32_1 = arith.constant 0 : i32
    return %c0_i32, %c0_i32_0 : i32, i32
  }
  func.func @transform_4(%arg0: i32) -> (i32, i32) {
    %c0_i32 = arith.constant 0 : i32
    %c0_i32_0 = arith.constant 0 : i32
    %c0_i32_1 = arith.constant 0 : i32
    return %c0_i32, %c0_i32_0 : i32, i32
  }
  func.func @transform_5(%arg0: i32) -> (i32, i32) {
    %c0_i32 = arith.constant 0 : i32
    %c0_i32_0 = arith.constant 0 : i32
    %c0_i32_1 = arith.constant 0 : i32
    return %c0_i32, %c0_i32_0 : i32, i32
  }
  func.func @transform_6(%arg0: i32) -> (i32, i32) {
    %c0_i32 = arith.constant 0 : i32
    %c0_i32_0 = arith.constant 0 : i32
    %c0_i32_1 = arith.constant 0 : i32
    return %c0_i32, %c0_i32_0 : i32, i32
  }
  func.func @transform_7(%arg0: i32) -> (i32, i32) {
    %c0_i32 = arith.constant 0 : i32
    %c0_i32_0 = arith.constant 0 : i32
    return %arg0, %c0_i32 : i32, i32
  }
}

</mosaic_0001>

<llo_original>
// kernel: tpu_custom_call.1
$region0: #{tpu_custom_call.1}
  #allocation0 [shape = 'u32[]', space=smem, size = 0x4, offset = 0x4, fixed_abs, tag = 'smem constant byte address 0x4 - core index']
  #allocation1 [shape = 'u32[144,128]{1,0:T(1,128)}', space=vmem, size = 0x12000, scoped, tag = 'internal scratch']
  %s0 = inlined_call_operand.vmem [shape: f32[16,4], index: 0, kind: input, shape index: {}]
  %s1 = inlined_call_operand.vmem [shape: f32[4,128], index: 1, kind: input, shape index: {}]
  %s2 = inlined_call_operand.vmem [shape: f32[1,128], index: 2, kind: input, shape index: {}]
  %s3 = inlined_call_operand.vmem [shape: f32[128,128], index: 3, kind: input, shape index: {}]
  %s4 = inlined_call_operand.vmem [shape: f32[1,128], index: 4, kind: input, shape index: {}]
  %s5 = inlined_call_operand.vmem [shape: f32[128,16], index: 5, kind: input, shape index: {}]
  %s6 = inlined_call_operand.vmem [shape: f32[1,16], index: 6, kind: input, shape index: {}]
  %s7 = inlined_call_operand.hbm [shape: f32[16,16], index: 7, kind: output, shape index: {}]
  %s8 = sld [smem:[#allocation0]]
  $region38: #{tpu_custom_call.1} parent=0
    _
  %s10 = ssub.s32 1, %s8
  %s11 = scalar_select 0, %s10, %s8
  $region1: #{tpu_custom_call.1} parent=0
    #allocation2 [shape = 'u8[8192]{0}', space=vmem, size = 0x2000, scoped, tag = 'output window, operand 0, single buffered']
    #allocation3 [shape = 's32[1]{0}', space=sflag, size = 0x4, scoped, tag = 'scoped memory for tpu_custom_call.1']
    %12 = vsyncpa [#allocation3], 0
    // Predicated region
    $region2: #{tpu_custom_call.1} parent=1 // pred_check
      _
    $region3: #{tpu_custom_call.1} parent=1 // pred_check_branch
      %14 = sbr.rel (0) target = $region5
    $region4: #{tpu_custom_call.1} parent=1 // pred_region
      _
    $region5: #{tpu_custom_call.1} parent=1 // pred_fallthru
      _
    // Predicated region
    $region6: #{tpu_custom_call.1} parent=1 // pred_check
      _
    $region7: #{tpu_custom_call.1} parent=1 // pred_check_branch
      %16 = sbr.rel (0) target = $region9
    $region8: #{tpu_custom_call.1} parent=1 // pred_region
      _
    $region9: #{tpu_custom_call.1} parent=1 // pred_fallthru
      _
    // Predicated region
    $region10: #{tpu_custom_call.1} parent=1 // pred_check
      _
    $region11: #{tpu_custom_call.1} parent=1 // pred_check_branch
      %18 = sbr.rel (0) target = $region13
    $region12: #{tpu_custom_call.1} parent=1 // pred_region
      _
    $region13: #{tpu_custom_call.1} parent=1 // pred_fallthru
      _
    // Predicated region
    $region14: #{tpu_custom_call.1} parent=1 // pred_check
      _
    $region15: #{tpu_custom_call.1} parent=1 // pred_check_branch
      %20 = sbr.rel (0) target = $region17
    $region16: #{tpu_custom_call.1} parent=1 // pred_region
      _
    $region17: #{tpu_custom_call.1} parent=1 // pred_fallthru
      _
    // Predicated region
    $region18: #{tpu_custom_call.1} parent=1 // pred_check
      _
    $region19: #{tpu_custom_call.1} parent=1 // pred_check_branch
      %22 = sbr.rel (0) target = $region21
    $region20: #{tpu_custom_call.1} parent=1 // pred_region
      _
    $region21: #{tpu_custom_call.1} parent=1 // pred_fallthru
      _
    // Predicated region
    $region22: #{tpu_custom_call.1} parent=1 // pred_check
      _
    $region23: #{tpu_custom_call.1} parent=1 // pred_check_branch
      %24 = sbr.rel (0) target = $region25
    $region24: #{tpu_custom_call.1} parent=1 // pred_region
      _
    $region25: #{tpu_custom_call.1} parent=1 // pred_fallthru
      _
    // Predicated region
    $region26: #{tpu_custom_call.1} parent=1 // pred_check
      _
    $region27: #{tpu_custom_call.1} parent=1 // pred_check_branch
      %26 = sbr.rel (0) target = $region29
    $region28: #{tpu_custom_call.1} parent=1 // pred_region
      _
    $region29: #{tpu_custom_call.1} parent=1 // pred_fallthru
      _
    %v27 = vld [vmem:[%s0] sm:$0xff]
    %v28 = vld [vmem:[%s0 + $0x8] sm:$0xff]
    %v29 = vld [vmem:[%s1] sm:$0xf]
    %v30 = vld [vmem:[%s2] sm:$0x1]
    %v32 = vlaneseq
    %v33 = vshrl.u32 %v32, 7
    %v34 = vsub.s32 0, %v33
    %v35 = vrot.slane %v30, %v34
    %vm37 = vcmask 31744
    %v39 = vsel %vm37, %v27, 0
    %v42 = vsel %vm37, %v28, 0
    %vm44 = vcmask 1043456
    %v46 = vsel %vm44, %v29, 0
    %48 = vmatprep.subr.mxu0 0.0
    %49 = vmatpush1.msra.mxu0 %v46
    %50 = vmatprep.subr.mxu0 0.0
    %51 = vmatpush1.msra.mxu0 0.0
    %52 = vmatprep.subr.mxu0 0.0
    %53 = vmatpush1.msra.mxu0 0.0
    %54 = vmatprep.subr.mxu0 0.0
    %55 = vmatpush1.msra.mxu0 0.0
    %56 = vmatprep.subr.mxu0 0.0
    %57 = vmatpush1.msra.mxu0 0.0
    %58 = vmatprep.subr.mxu0 0.0
    %59 = vmatpush1.msra.mxu0 0.0
    %60 = vmatprep.subr.mxu0 0.0
    %61 = vmatpush1.msra.mxu0 0.0
    %62 = vmatprep.subr.mxu0 0.0
    %63 = vmatpush1.msra.mxu0 0.0
    %64 = vmatprep.subr.mxu0 0.0
    %65 = vmatpush1.msra.mxu0 0.0
    %66 = vmatprep.subr.mxu0 0.0
    %67 = vmatpush1.msra.mxu0 0.0
    %68 = vmatprep.subr.mxu0 0.0
    %69 = vmatpush1.msra.mxu0 0.0
    %70 = vmatprep.subr.mxu0 0.0
    %71 = vmatpush1.msra.mxu0 0.0
    %72 = vmatprep.subr.mxu0 0.0
    %73 = vmatpush1.msra.mxu0 0.0
    %74 = vmatprep.subr.mxu0 0.0
    %75 = vmatpush1.msra.mxu0 0.0
    %76 = vmatprep.subr.mxu0 0.0
    %77 = vmatpush1.msra.mxu0 0.0
    %78 = vmatprep.subr.mxu0 0.0
    %79 = vmatpush1.msra.mxu0 0.0
    %80 = vmatprep.subr.mxu0 0.0
    %81 = vmatpush1.msra.mxu0 0.0
    %82 = vmatprep.subr.mxu0 0.0
    %83 = vmatpush1.msra.mxu0 0.0
    %84 = vmatprep.subr.mxu0 0.0
    %85 = vmatpush1.msra.mxu0 0.0
    %86 = vmatprep.subr.mxu0 0.0
    %87 = vmatpush1.msra.mxu0 0.0
    %88 = vmatprep.subr.mxu0 0.0
    %89 = vmatpush1.msra.mxu0 0.0
    %90 = vmatprep.subr.mxu0 0.0
    %91 = vmatpush1.msra.mxu0 0.0
    %92 = vmatprep.subr.mxu0 0.0
    %93 = vmatpush1.msra.mxu0 0.0
    %94 = vmatprep.subr.mxu0 0.0
    %95 = vmatpush1.msra.mxu0 0.0
    %96 = vmatprep.subr.mxu0 0.0
    %97 = vmatpush1.msra.mxu0 0.0
    %98 = vmatprep.subr.mxu0 0.0
    %99 = vmatpush1.msra.mxu0 0.0
    %100 = vmatprep.subr.mxu0 0.0
    %101 = vmatpush1.msra.mxu0 0.0
    %102 = vmatprep.subr.mxu0 0.0
    %103 = vmatpush1.msra.mxu0 0.0
    %104 = vmatprep.subr.mxu0 0.0
    %105 = vmatpush1.msra.mxu0 0.0
    %106 = vmatprep.subr.mxu0 0.0
    %107 = vmatpush1.msra.mxu0 0.0
    %108 = vmatprep.subr.mxu0 0.0
    %109 = vmatpush1.msra.mxu0 0.0
    %110 = vmatprep.subr.mxu0 0.0
    %111 = vmatpush1.msra.mxu0 0.0
    %112 = vmatprep.mubr.f32.mxu0 0.0
    %113 = vmatmul.mubr.f32.gmra.mrb[0].mxu0 %v39
    %v114 = vpop.f32.mrb[0].mxu0
    %v115 = vadd.f32 %v35, %v114
    %v116 = vpop.f32.mrb[0].mxu0
    %117 = vmatprep.mubr.f32.mxu0 0.0
    %118 = vmatmul.mubr.f32.gmra.mrb[0].mxu0 %v42
    %v119 = vpop.f32.mrb[0].mxu0
    %v120 = vadd.f32 %v35, %v119
    %v121 = vpop.f32.mrb[0].mxu0
    %122 = vdwg.mxu0
    %v123 = vmax.f32 %v115, 0.0
    %v124 = vmax.f32 %v120, 0.0
    %v125 = vld [vmem:[%s3] sm:$0xff]
    %v126 = vld [vmem:[%s3 + $0x8] sm:$0xff]
    %v127 = vld [vmem:[%s3 + $0x10] sm:$0xff]
    %v128 = vld [vmem:[%s3 + $0x18] sm:$0xff]
    %v129 = vld [vmem:[%s3 + $0x20] sm:$0xff]
    %v130 = vld [vmem:[%s3 + $0x28] sm:$0xff]
    %v131 = vld [vmem:[%s3 + $0x30] sm:$0xff]
    %v132 = vld [vmem:[%s3 + $0x38] sm:$0xff]
    %v133 = vld [vmem:[%s3 + $0x40] sm:$0xff]
    %v134 = vld [vmem:[%s3 + $0x48] sm:$0xff]
    %v135 = vld [vmem:[%s3 + $0x50] sm:$0xff]
    %v136 = vld [vmem:[%s3 + $0x58] sm:$0xff]
    %v137 = vld [vmem:[%s3 + $0x60] sm:$0xff]
    %v138 = vld [vmem:[%s3 + $0x68] sm:$0xff]
    %v139 = vld [vmem:[%s3 + $0x70] sm:$0xff]
    %v140 = vld [vmem:[%s3 + $0x78] sm:$0xff]
    %v141 = vld [vmem:[%s4] sm:$0x1]
    %v143 = vlaneseq
    %v144 = vshrl.u32 %v143, 7
    %v145 = vsub.s32 0, %v144
    %v146 = vrot.slane %v141, %v145
    %148 = vmatprep.subr.mxu0 0.0
    %149 = vmatpush1.msra.mxu0 %v125
    %150 = vmatprep.subr.mxu0 0.0
    %151 = vmatpush1.msra.mxu0 %v126
    %152 = vmatprep.subr.mxu0 0.0
    %153 = vmatpush1.msra.mxu0 %v127
    %154 = vmatprep.subr.mxu0 0.0
    %155 = vmatpush1.msra.mxu0 %v128
    %156 = vmatprep.subr.mxu0 0.0
    %157 = vmatpush1.msra.mxu0 %v129
    %158 = vmatprep.subr.mxu0 0.0
    %159 = vmatpush1.msra.mxu0 %v130
    %160 = vmatprep.subr.mxu0 0.0
    %161 = vmatpush1.msra.mxu0 %v131
    %162 = vmatprep.subr.mxu0 0.0
    %163 = vmatpush1.msra.mxu0 %v132
    %164 = vmatprep.subr.mxu0 0.0
    %165 = vmatpush1.msra.mxu0 %v133
    %166 = vmatprep.subr.mxu0 0.0
    %167 = vmatpush1.msra.mxu0 %v134
    %168 = vmatprep.subr.mxu0 0.0
    %169 = vmatpush1.msra.mxu0 %v135
    %170 = vmatprep.subr.mxu0 0.0
    %171 = vmatpush1.msra.mxu0 %v136
    %172 = vmatprep.subr.mxu0 0.0
    %173 = vmatpush1.msra.mxu0 %v137
    %174 = vmatprep.subr.mxu0 0.0
    %175 = vmatpush1.msra.mxu0 %v138
    %176 = vmatprep.subr.mxu0 0.0
    %177 = vmatpush1.msra.mxu0 %v139
    %178 = vmatprep.subr.mxu0 0.0
    %179 = vmatpush1.msra.mxu0 %v140
    %180 = vmatprep.subr.mxu0 0.0
    %181 = vmatpush1.msra.mxu0 0.0
    %182 = vmatprep.subr.mxu0 0.0
    %183 = vmatpush1.msra.mxu0 0.0
    %184 = vmatprep.subr.mxu0 0.0
    %185 = vmatpush1.msra.mxu0 0.0
    %186 = vmatprep.subr.mxu0 0.0
    %187 = vmatpush1.msra.mxu0 0.0
    %188 = vmatprep.subr.mxu0 0.0
    %189 = vmatpush1.msra.mxu0 0.0
    %190 = vmatprep.subr.mxu0 0.0
    %191 = vmatpush1.msra.mxu0 0.0
    %192 = vmatprep.subr.mxu0 0.0
    %193 = vmatpush1.msra.mxu0 0.0
    %194 = vmatprep.subr.mxu0 0.0
    %195 = vmatpush1.msra.mxu0 0.0
    %196 = vmatprep.subr.mxu0 0.0
    %197 = vmatpush1.msra.mxu0 0.0
    %198 = vmatprep.subr.mxu0 0.0
    %199 = vmatpush1.msra.mxu0 0.0
    %200 = vmatprep.subr.mxu0 0.0
    %201 = vmatpush1.msra.mxu0 0.0
    %202 = vmatprep.subr.mxu0 0.0
    %203 = vmatpush1.msra.mxu0 0.0
    %204 = vmatprep.subr.mxu0 0.0
    %205 = vmatpush1.msra.mxu0 0.0
    %206 = vmatprep.subr.mxu0 0.0
    %207 = vmatpush1.msra.mxu0 0.0
    %208 = vmatprep.subr.mxu0 0.0
    %209 = vmatpush1.msra.mxu0 0.0
    %210 = vmatprep.subr.mxu0 0.0
    %211 = vmatpush1.msra.mxu0 0.0
    %212 = vmatprep.mubr.f32.mxu0 0.0
    %213 = vmatmul.mubr.f32.gmra.mrb[0].mxu0 %v123
    %v214 = vpop.f32.mrb[0].mxu0
    %v215 = vadd.f32 %v146, %v214
    %v216 = vpop.f32.mrb[0].mxu0
    %217 = vmatprep.mubr.f32.mxu0 0.0
    %218 = vmatmul.mubr.f32.gmra.mrb[0].mxu0 %v124
    %v219 = vpop.f32.mrb[0].mxu0
    %v220 = vadd.f32 %v146, %v219
    %v221 = vpop.f32.mrb[0].mxu0
    %222 = vdwg.mxu0
    %v223 = vmax.f32 %v215, 0.0
    %v224 = vmax.f32 %v220, 0.0
    %v225 = vld [vmem:[%s5] sm:$0xff]
    %v226 = vld [vmem:[%s5 + $0x8] sm:$0xff]
    %v227 = vld [vmem:[%s5 + $0x10] sm:$0xff]
    %v228 = vld [vmem:[%s5 + $0x18] sm:$0xff]
    %v229 = vld [vmem:[%s5 + $0x20] sm:$0xff]
    %v230 = vld [vmem:[%s5 + $0x28] sm:$0xff]
    %v231 = vld [vmem:[%s5 + $0x30] sm:$0xff]
    %v232 = vld [vmem:[%s5 + $0x38] sm:$0xff]
    %v233 = vld [vmem:[%s5 + $0x40] sm:$0xff]
    %v234 = vld [vmem:[%s5 + $0x48] sm:$0xff]
    %v235 = vld [vmem:[%s5 + $0x50] sm:$0xff]
    %v236 = vld [vmem:[%s5 + $0x58] sm:$0xff]
    %v237 = vld [vmem:[%s5 + $0x60] sm:$0xff]
    %v238 = vld [vmem:[%s5 + $0x68] sm:$0xff]
    %v239 = vld [vmem:[%s5 + $0x70] sm:$0xff]
    %v240 = vld [vmem:[%s5 + $0x78] sm:$0xff]
    %v241 = vld [vmem:[%s6] sm:$0x1]
    %v243 = vlaneseq
    %v244 = vshrl.u32 %v243, 7
    %v245 = vsub.s32 0, %v244
    %v246 = vrot.slane %v241, %v245
    %248 = vmatprep.subr.mxu0 0.0
    %249 = vmatpush1.msra.mxu0 %v225
    %250 = vmatprep.subr.mxu0 0.0
    %251 = vmatpush1.msra.mxu0 %v226
    %252 = vmatprep.subr.mxu0 0.0
    %253 = vmatpush1.msra.mxu0 %v227
    %254 = vmatprep.subr.mxu0 0.0
    %255 = vmatpush1.msra.mxu0 %v228
    %256 = vmatprep.subr.mxu0 0.0
    %257 = vmatpush1.msra.mxu0 %v229
    %258 = vmatprep.subr.mxu0 0.0
    %259 = vmatpush1.msra.mxu0 %v230
    %260 = vmatprep.subr.mxu0 0.0
    %261 = vmatpush1.msra.mxu0 %v231
    %262 = vmatprep.subr.mxu0 0.0
    %263 = vmatpush1.msra.mxu0 %v232
    %264 = vmatprep.subr.mxu0 0.0
    %265 = vmatpush1.msra.mxu0 %v233
    %266 = vmatprep.subr.mxu0 0.0
    %267 = vmatpush1.msra.mxu0 %v234
    %268 = vmatprep.subr.mxu0 0.0
    %269 = vmatpush1.msra.mxu0 %v235
    %270 = vmatprep.subr.mxu0 0.0
    %271 = vmatpush1.msra.mxu0 %v236
    %272 = vmatprep.subr.mxu0 0.0
    %273 = vmatpush1.msra.mxu0 %v237
    %274 = vmatprep.subr.mxu0 0.0
    %275 = vmatpush1.msra.mxu0 %v238
    %276 = vmatprep.subr.mxu0 0.0
    %277 = vmatpush1.msra.mxu0 %v239
    %278 = vmatprep.subr.mxu0 0.0
    %279 = vmatpush1.msra.mxu0 %v240
    %280 = vmatprep.subr.mxu0 0.0
    %281 = vmatpush1.msra.mxu0 0.0
    %282 = vmatprep.subr.mxu0 0.0
    %283 = vmatpush1.msra.mxu0 0.0
    %284 = vmatprep.subr.mxu0 0.0
    %285 = vmatpush1.msra.mxu0 0.0
    %286 = vmatprep.subr.mxu0 0.0
    %287 = vmatpush1.msra.mxu0 0.0
    %288 = vmatprep.subr.mxu0 0.0
    %289 = vmatpush1.msra.mxu0 0.0
    %290 = vmatprep.subr.mxu0 0.0
    %291 = vmatpush1.msra.mxu0 0.0
    %292 = vmatprep.subr.mxu0 0.0
    %293 = vmatpush1.msra.mxu0 0.0
    %294 = vmatprep.subr.mxu0 0.0
    %295 = vmatpush1.msra.mxu0 0.0
    %296 = vmatprep.subr.mxu0 0.0
    %297 = vmatpush1.msra.mxu0 0.0
    %298 = vmatprep.subr.mxu0 0.0
    %299 = vmatpush1.msra.mxu0 0.0
    %300 = vmatprep.subr.mxu0 0.0
    %301 = vmatpush1.msra.mxu0 0.0
    %302 = vmatprep.subr.mxu0 0.0
    %303 = vmatpush1.msra.mxu0 0.0
    %304 = vmatprep.subr.mxu0 0.0
    %305 = vmatpush1.msra.mxu0 0.0
    %306 = vmatprep.subr.mxu0 0.0
    %307 = vmatpush1.msra.mxu0 0.0
    %308 = vmatprep.subr.mxu0 0.0
    %309 = vmatpush1.msra.mxu0 0.0
    %310 = vmatprep.subr.mxu0 0.0
    %311 = vmatpush1.msra.mxu0 0.0
    %312 = vmatprep.mubr.f32.mxu0 0.0
    %313 = vmatmul.mubr.f32.gmra.mrb[0].mxu0 %v223
    %v314 = vpop.f32.mrb[0].mxu0
    %v315 = vadd.f32 %v246, %v314
    %v316 = vpop.f32.mrb[0].mxu0
    %317 = vmatprep.mubr.f32.mxu0 0.0
    %318 = vmatmul.mubr.f32.gmra.mrb[0].mxu0 %v224
    %v319 = vpop.f32.mrb[0].mxu0
    %v320 = vadd.f32 %v246, %v319
    %v321 = vpop.f32.mrb[0].mxu0
    %322 = vdwg.mxu0
    %vm323 = vcmask 130048
    %324 = vst.msk [vmem:[#allocation2] sm:$0xff] %vm323, %v315
    %325 = vst.msk [vmem:[#allocation2 + $0x8] sm:$0xff] %vm323, %v320
    // Predicated region
    $region30: #{tpu_custom_call.1} parent=1 // pred_check
      _
    $region31: #{tpu_custom_call.1} parent=1 // pred_check_branch
      %327 = sbr.rel (0) target = $region33
    $region32: #{tpu_custom_call.1} parent=1 // pred_region
      %s329 = ssub.s32 256, 256
      %330 = vsyncadd [#allocation3], %s329
      %s331 = sshll.u32 [#allocation2], 4
      %s332 = int_to_ptr.vmem [resolvable:$true] %s331
      %337 = dma.vmem_to_hbm [thread:$0]  %s332, 256, %s7, [#allocation3], 128, 128, 8
    $region33: #{tpu_custom_call.1} parent=1 // pred_fallthru
      _
    // Predicated region
    $region34: #{tpu_custom_call.1} parent=1 // pred_check
      _
    $region35: #{tpu_custom_call.1} parent=1 // pred_check_branch
      %339 = sbr.rel (0) target = $region37
    $region36: #{tpu_custom_call.1} parent=1 // pred_region
      %340 = dma.done [#allocation3], 256
    $region37: #{tpu_custom_call.1} parent=1 // pred_fallthru
      _
    %341 = vsyncpa [#allocation3], 1

</llo_original>
